<compile_context>
chip_gen: v5e
topology: v5e:2x2
jax: 0.10.0
libtpu: 0.0.40
codegen_flags: <defaults>
</compile_context>

<pallas_src>
import jax
import jax.numpy as jnp
from jax.experimental import pallas as pl
from jax.experimental.pallas import tpu as pltpu


def _identity_kernel(x_ref, o_ref):
    # Elementwise copy of the current VMEM tile (the whole "hot path").
    o_ref[...] = x_ref[...]


def _tiled_copy_2d(x2):
    """Row-tiled, lane-aware identity copy of a 2-D slab."""
    R, C = x2.shape
    itemsize = jnp.dtype(x2.dtype).itemsize

    # ~2 MiB blocks: large enough to sit near the HBM roofline (measured ~85%
    # at 2 MiB-class tiles), small enough that double-buffered input + output
    # blocks fit the scoped-VMEM default on every generation (v5e 16 MiB,
    # v6e 32 MiB, v7x 32/64 MiB).
    target_bytes = 2 * 1024 * 1024
    tr = max(8, (target_bytes // max(1, C * itemsize)) // 8 * 8)  # sublane-aligned
    if tr >= R:
        tr = R  # full-extent block: exempt from the 8-row divisibility rule

    grid = (pl.cdiv(R, tr),)

    return pl.pallas_call(
        _identity_kernel,
        out_shape=jax.ShapeDtypeStruct((R, C), x2.dtype),
        grid=grid,
        in_specs=[pl.BlockSpec((tr, C), lambda i: (i, 0))],
        out_specs=pl.BlockSpec((tr, C), lambda i: (i, 0)),
        # Output aliases the input: with a donated input the kernel is
        # writeback-free; otherwise XLA inserts at most one copy, which is
        # exactly the memcpy it replaces (never worse).
        input_output_aliases={0: 0},
        compiler_params=pltpu.CompilerParams(
            dimension_semantics=("parallel",),  # shard rows across v7x's 2 TCs
        ),
    )(x2)


def identity(x):
    """Pallas Identity: returns x unchanged (same shape, dtype, values)."""
    orig_shape = x.shape

    if x.size == 0:
        return x  # nothing to move

    # Flatten and re-view as a lane-dense (R, C) slab with C a multiple of 128.
    flat = x.reshape(-1)
    n = flat.shape[0]

    slab_c = None
    for cand in (1024, 2048, 4096, 512, 256, 128):
        if n % cand == 0:
            slab_c = cand
            break

    if slab_c is not None:
        x2 = flat.reshape(n // slab_c, slab_c)
    else:
        # Fallback for element counts not divisible by 128: single full-array
        # block (exempt from the (8,128) rule).
        # TODO(synk): pad to a 128 multiple + slice if huge ragged inputs ever
        # need tiling here; not needed for ViT-style activation shapes.
        x2 = flat.reshape(1, n)

    out2 = _tiled_copy_2d(x2)
    return out2.reshape(orig_shape)


if __name__ == "__main__":
    key = jax.random.PRNGKey(0)
    # Small shape consistent with a ViT feature map replaced by Identity:
    # (batch=2, channels=4, spatial=16x16).
    x = jax.random.normal(key, (2, 4, 16, 16), dtype=jnp.float32)

    y = identity(x)
    jax.block_until_ready(y)

    assert y.shape == x.shape
    assert y.dtype == x.dtype
    assert bool(jnp.all(y == x))

    # Also exercise an odd shape that takes the fallback path.
    x_odd = jax.random.normal(key, (3, 5, 7), dtype=jnp.float32)
    y_odd = identity(x_odd)
    jax.block_until_ready(y_odd)
    assert y_odd.shape == x_odd.shape
    assert bool(jnp.all(y_odd == x_odd))

    print("KERNEL_OK")
</pallas_src>

<mosaic_0001>
module attributes {stable_mosaic.version = 11 : i64} {
  func.func @_identity_kernel(%arg0: i32, %arg1: memref<2x1024xf32, #tpu.memory_space<vmem>>, %arg2: memref<2x1024xf32, #tpu.memory_space<vmem>>) attributes {dimension_semantics = [#tpu.dimension_semantics<parallel>], iteration_bounds = array<i64: 1>, scalar_prefetch = 0 : i64, scratch_operands = 0 : i64, tpu.core_type = #tpu.core_type<tc>, window_params = [{transform_indices = @transform_0, window_bounds = array<i64: 2, 1024>}, {transform_indices = @transform_1, window_bounds = array<i64: 2, 1024>}]} {
    %c0 = arith.constant 0 : index
    %c0_0 = arith.constant 0 : index
    %0 = vector.load %arg1[%c0, %c0_0] : memref<2x1024xf32, #tpu.memory_space<vmem>>, vector<2x1024xf32>
    %c0_1 = arith.constant 0 : index
    %c0_2 = arith.constant 0 : index
    %1 = vector.load %arg2[%c0_1, %c0_2] : memref<2x1024xf32, #tpu.memory_space<vmem>>, vector<2x1024xf32>
    tpu.vector_store %arg2[%c0_1, %c0_2], %0 {strides = array<i32>} : memref<2x1024xf32, #tpu.memory_space<vmem>>, vector<2x1024xf32>,
    return
  }
  func.func @transform_0(%arg0: i32) -> (i32, i32) {
    %c0_i32 = arith.constant 0 : i32
    %c0_i32_0 = arith.constant 0 : i32
    return %arg0, %c0_i32 : i32, i32
  }
  func.func @transform_1(%arg0: i32) -> (i32, i32) {
    %c0_i32 = arith.constant 0 : i32
    %c0_i32_0 = arith.constant 0 : i32
    return %arg0, %c0_i32 : i32, i32
  }
}

</mosaic_0001>

<llo_original>
// kernel: tpu_custom_call.1
$region0: #{tpu_custom_call.1}
  #allocation0 [shape = 'u32[]', space=smem, size = 0x4, offset = 0x4, fixed_abs, tag = 'smem constant byte address 0x4 - core index']
  #allocation1 [shape = 'u32[72,128]{1,0:T(1,128)}', space=vmem, size = 0x9000, scoped, tag = 'internal scratch']
  %s0 = inlined_call_operand.hbm [shape: f32[2,1024], index: 0, kind: input, shape index: {}, may-alias: {0,1}]
  %s1 = inlined_call_operand.hbm [shape: f32[2,1024], index: 1, kind: output, shape index: {}, may-alias: {0,1}]
  %s2 = sld [smem:[#allocation0]]
  $region18: #{tpu_custom_call.1} parent=0
    _
  %s4 = ssub.s32 1, %s2
  %s5 = scalar_select 0, %s4, %s2
  $region1: #{tpu_custom_call.1} parent=0
    #allocation2 [shape = 'u8[8192]{0}', space=vmem, size = 0x2000, scoped, tag = 'input window, operand 0, single buffered']
    #allocation3 [shape = 's32[1]{0}', space=sflag, size = 0x4, scoped, tag = 'scoped memory for tpu_custom_call.1']
    #allocation4 [shape = 's32[1]{0}', space=sflag, size = 0x4, scoped, tag = 'scoped memory for tpu_custom_call.1']
    #allocation5 [shape = 'u8[8192]{0}', space=vmem, size = 0x2000, scoped, tag = 'output window, operand 0, single buffered']
    %6 = vsyncpa [#allocation3], 0
    %7 = vsyncpa [#allocation4], 0
    // Predicated region
    $region2: #{tpu_custom_call.1} parent=1 // pred_check
      _
    $region3: #{tpu_custom_call.1} parent=1 // pred_check_branch
      %9 = sbr.rel (0) target = $region5
    $region4: #{tpu_custom_call.1} parent=1 // pred_region
      %11 = vsyncadd [#allocation3], 0
      %s13 = sshll.u32 %s0, 4
      %s14 = int_to_ptr.hbm [resolvable:$true] %s13
      %s15 = sshll.u32 [#allocation2], 4
      %s16 = int_to_ptr.vmem [resolvable:$true] %s15
      %18 = dma.hbm_to_vmem [thread:$0]  %s14, 256, %s16, [#allocation3]
    $region5: #{tpu_custom_call.1} parent=1 // pred_fallthru
      _
    // Predicated region
    $region6: #{tpu_custom_call.1} parent=1 // pred_check
      _
    $region7: #{tpu_custom_call.1} parent=1 // pred_check_branch
      %20 = sbr.rel (0) target = $region9
    $region8: #{tpu_custom_call.1} parent=1 // pred_region
      %22 = dma.done [#allocation3], 256
    $region9: #{tpu_custom_call.1} parent=1 // pred_fallthru
      _
    %v23 = vld [vmem:[#allocation2] sm:$0xff]
    %v24 = vld [vmem:[#allocation2 + $0x8] sm:$0xff]
    %25 = vst [vmem:[#allocation5] sm:$0xff] %v23
    %26 = vst [vmem:[#allocation5 + $0x8] sm:$0xff] %v24
    // Predicated region
    $region10: #{tpu_custom_call.1} parent=1 // pred_check
      _
    $region11: #{tpu_custom_call.1} parent=1 // pred_check_branch
      %28 = sbr.rel (0) target = $region13
    $region12: #{tpu_custom_call.1} parent=1 // pred_region
      %30 = vsyncadd [#allocation4], 0
      %s32 = sshll.u32 [#allocation5], 4
      %s33 = int_to_ptr.vmem [resolvable:$true] %s32
      %s34 = sshll.u32 %s1, 4
      %s35 = int_to_ptr.hbm [resolvable:$true] %s34
      %37 = dma.vmem_to_hbm [thread:$0]  %s33, 256, %s35, [#allocation4]
    $region13: #{tpu_custom_call.1} parent=1 // pred_fallthru
      _
    // Predicated region
    $region14: #{tpu_custom_call.1} parent=1 // pred_check
      _
    $region15: #{tpu_custom_call.1} parent=1 // pred_check_branch
      %39 = sbr.rel (0) target = $region17
    $region16: #{tpu_custom_call.1} parent=1 // pred_region
      %41 = dma.done [#allocation4], 256
    $region17: #{tpu_custom_call.1} parent=1 // pred_fallthru
      _
    %42 = vsyncpa [#allocation3], 1
    %43 = vsyncpa [#allocation4], 1

</llo_original>
